<compile_context>
chip_gen: v5e
topology: v5e:2x2
jax: 0.10.0
libtpu: 0.0.40
codegen_flags: <defaults>
</compile_context>

<pallas_src>
import functools

import jax
import jax.numpy as jnp
from jax import lax
from jax.experimental import pallas as pl
from jax.experimental.pallas import tpu as pltpu


_EPS = 1e-07

# Per-input VMEM block target for the tiled paths. 2 inputs x 2 pipeline
# buffers x 4 MiB = 16 MiB; vmem_limit_bytes is raised to 32 MiB, which is
# safe on all generations (v5e/v6e physical VMEM 128 MiB; v7x default scoped
# limit is already 32 MiB of its 64 MiB).
_BLOCK_BYTES_TARGET = 4 * 1024 * 1024
_VMEM_LIMIT_BYTES = 32 * 1024 * 1024

# Single-block (un-gridded) path budget, in f32-equivalent bytes of BOTH
# inputs (the on-chip upcast means f32-sized intermediates even for bf16).
_SMALL_BYTES_BUDGET = 8 * 1024 * 1024


def _round_up(x, m):
    return ((x + m - 1) // m) * m


def _round_down(x, m):
    return (x // m) * m


def _cost(adv, ori, B, N):
    itemsize = adv.dtype.itemsize
    return pl.CostEstimate(
        flops=3 * B * N + 2 * B,
        transcendentals=B,
        bytes_accessed=int(adv.size * itemsize + ori.size * itemsize + B * 8),
    )


# ---------------------------------------------------------------------------
# Small path: one block resident in VMEM, everything fused (weights + mean).
# ---------------------------------------------------------------------------
def _l2dist_fused_kernel(adv_ref, ori_ref, w_ref, out_ref, *, batch_avg, inv_b):
    # adv_ref / ori_ref: [B, N] (native dtype) in VMEM; w_ref: [B, 1] f32.
    # Upcast on-chip (VPU slot has slack; required on v5e anyway); f32 accum.
    diff = adv_ref[...].astype(jnp.float32) - ori_ref[...].astype(jnp.float32)
    ss = jnp.sum(diff * diff, axis=1, keepdims=True)          # -> [B, 1]
    d = jnp.sqrt(ss + jnp.float32(_EPS)) * w_ref[...]         # [B, 1]
    if batch_avg:
        # Fold the batch mean into the kernel: single [1, 1] output.
        out_ref[...] = jnp.sum(d, axis=0, keepdims=True) * jnp.float32(inv_b)
    else:
        out_ref[...] = d


def _l2_dist_small(adv, ori, w, batch_avg, B, N):
    out_rows = 1 if batch_avg else B
    kernel = functools.partial(
        _l2dist_fused_kernel, batch_avg=batch_avg, inv_b=1.0 / B)
    out = pl.pallas_call(
        kernel,
        out_shape=jax.ShapeDtypeStruct((out_rows, 1), jnp.float32),
        # No grid / index_maps: single invocation, full-array VMEM blocks,
        # no pipelining machinery or double buffers.
        in_specs=[
            pl.BlockSpec(memory_space=pltpu.MemorySpace.VMEM),
            pl.BlockSpec(memory_space=pltpu.MemorySpace.VMEM),
            pl.BlockSpec(memory_space=pltpu.MemorySpace.VMEM),
        ],
        out_specs=pl.BlockSpec(memory_space=pltpu.MemorySpace.VMEM),
        compiler_params=pltpu.CompilerParams(
            vmem_limit_bytes=_VMEM_LIMIT_BYTES),
        cost_estimate=_cost(adv, ori, B, N),
    )(adv, ori, w)
    if batch_avg:
        return out[0, 0]
    return out[:, 0]


# ---------------------------------------------------------------------------
# Tiled path A: full-row (bb, N) blocks, grid over batch tiles only.
# ---------------------------------------------------------------------------
def _l2dist_rows_kernel(adv_ref, ori_ref, w_ref, out_ref):
    diff = adv_ref[...].astype(jnp.float32) - ori_ref[...].astype(jnp.float32)
    ss = jnp.sum(diff * diff, axis=1, keepdims=True)
    out_ref[...] = jnp.sqrt(ss + jnp.float32(_EPS)) * w_ref[...]


def _l2_dist_rows(adv, ori, w, B, N, sub):
    itemsize = adv.dtype.itemsize
    # Largest batch tile (multiple of the sublane quantum) whose (bb, N)
    # f-row block stays under the per-input byte target.
    bb = min(_round_up(B, sub),
             max(sub, _round_down(_BLOCK_BYTES_TARGET // max(1, N * itemsize), sub)))
    if B > sub:
        # Keep >=2 tiles on the parallel batch axis for v7x's 2 TensorCores.
        bb = min(bb, _round_up(pl.cdiv(B, 2), sub))
    bb = max(bb, sub)
    grid_b = pl.cdiv(B, bb)

    dist = pl.pallas_call(
        _l2dist_rows_kernel,
        out_shape=jax.ShapeDtypeStruct((B, 1), jnp.float32),
        grid=(grid_b,),
        in_specs=[
            pl.BlockSpec((bb, N), lambda i: (i, 0)),
            pl.BlockSpec((bb, N), lambda i: (i, 0)),
            pl.BlockSpec((bb, 1), lambda i: (i, 0)),
        ],
        out_specs=pl.BlockSpec((bb, 1), lambda i: (i, 0)),
        compiler_params=pltpu.CompilerParams(
            dimension_semantics=("parallel",),
            vmem_limit_bytes=_VMEM_LIMIT_BYTES),
        cost_estimate=_cost(adv, ori, B, N),
    )(adv, ori, w)
    # Partial tail batch block (if any) only ever writes rows < B; garbage
    # rows inside the block are per-row independent and never stored.
    return dist[:, 0]


# ---------------------------------------------------------------------------
# Tiled path B: huge lane chunks + VMEM accumulator (only for very large N).
# ---------------------------------------------------------------------------
def _l2dist_chunked_kernel(adv_ref, ori_ref, w_ref, out_ref, acc_ref, *,
                           n_true, bn):
    k = pl.program_id(1)                          # reduction axis is LAST

    @pl.when(k == 0)
    def _():
        acc_ref[...] = jnp.zeros_like(acc_ref)

    diff = adv_ref[...].astype(jnp.float32) - ori_ref[...].astype(jnp.float32)
    # Mask the tail lane chunk against the true N: the inputs are NOT padded
    # in HBM and Pallas does not zero-fill out-of-range block reads.
    col = lax.broadcasted_iota(jnp.int32, diff.shape, 1) + k * bn
    diff = jnp.where(col < n_true, diff, jnp.float32(0.0))
    # Wide-row reduce: bn/128 - 1 VPU vreg adds + a single XLU cross-lane
    # reduce per 8-row group per step (negligible vs. the multi-MiB DMA).
    acc_ref[...] += jnp.sum(diff * diff, axis=1, keepdims=True)

    @pl.when(k == pl.num_programs(1) - 1)
    def _():
        out_ref[...] = jnp.sqrt(acc_ref[...] + jnp.float32(_EPS)) * w_ref[...]


def _l2_dist_chunked(adv, ori, w, B, N, sub):
    itemsize = adv.dtype.itemsize
    bb = sub                                       # minimal sublane tile
    bn = max(128, _round_down(_BLOCK_BYTES_TARGET // (bb * itemsize), 128))
    grid = (pl.cdiv(B, bb), pl.cdiv(N, bn))        # reduction axis last

    kernel = functools.partial(_l2dist_chunked_kernel, n_true=N, bn=bn)
    dist = pl.pallas_call(
        kernel,
        out_shape=jax.ShapeDtypeStruct((B, 1), jnp.float32),
        grid_spec=pltpu.PrefetchScalarGridSpec(
            num_scalar_prefetch=0,
            grid=grid,
            in_specs=[
                pl.BlockSpec((bb, bn), lambda i, k: (i, k)),
                pl.BlockSpec((bb, bn), lambda i, k: (i, k)),
                pl.BlockSpec((bb, 1), lambda i, k: (i, 0)),
            ],
            out_specs=pl.BlockSpec((bb, 1), lambda i, k: (i, 0)),
            scratch_shapes=[pltpu.VMEM((bb, 1), jnp.float32)],
        ),
        compiler_params=pltpu.CompilerParams(
            dimension_semantics=("parallel", "arbitrary"),
            vmem_limit_bytes=_VMEM_LIMIT_BYTES),
        cost_estimate=_cost(adv, ori, B, N),
    )(adv, ori, w)
    return dist[:, 0]


# ---------------------------------------------------------------------------
# Public entry point (matches L2Dist.forward semantics).
# ---------------------------------------------------------------------------
def l2_dist(adv_pc, ori_pc, weights=None, batch_avg=True):
    """adv_pc, ori_pc: [B, K, 3] or [B, 3, K]; weights: optional [B]."""
    B = adv_pc.shape[0]
    # Flatten the reduction dims onto the lane axis; summing over dims [1,2]
    # equals summing over the flattened last axis, so this is layout-invariant
    # for [B,K,3] vs [B,3,K]. Inputs keep their native dtype (upcast on-chip).
    adv = adv_pc.reshape(B, -1)
    ori = ori_pc.reshape(B, -1)
    N = adv.shape[1]
    if weights is None:
        w = jnp.ones((B, 1), dtype=jnp.float32)
    else:
        w = jnp.asarray(weights).astype(jnp.float32).reshape(B, 1)

    itemsize = jnp.dtype(adv.dtype).itemsize
    sub = max(8, 32 // itemsize)      # sublane quantum: 8 f32, 16 bf16 rows

    # Byte-based dispatch: single-block path whenever the whole problem
    # (f32-equivalent) comfortably fits in scoped VMEM; otherwise stream.
    resident_f32_bytes = 2 * B * N * 4
    if resident_f32_bytes <= _SMALL_BYTES_BUDGET:
        return _l2_dist_small(adv, ori, w, batch_avg, B, N)

    if N * itemsize * sub <= _BLOCK_BYTES_TARGET:
        dist = _l2_dist_rows(adv, ori, w, B, N, sub)       # no reduction axis
    else:
        dist = _l2_dist_chunked(adv, ori, w, B, N, sub)    # accumulator path
    if batch_avg:
        return dist.mean()
    return dist


# ---------------------------------------------------------------------------
# Pure-JAX reference.
# ---------------------------------------------------------------------------
def _reference(adv_pc, ori_pc, weights=None, batch_avg=True):
    B = adv_pc.shape[0]
    if weights is None:
        weights = jnp.ones((B,), dtype=jnp.float32)
    a = adv_pc.astype(jnp.float32)
    o = ori_pc.astype(jnp.float32)
    d = jnp.sqrt(jnp.sum((a - o) ** 2, axis=(1, 2)) + 1e-07)
    d = d * jnp.asarray(weights).astype(jnp.float32)
    return d.mean() if batch_avg else d


if __name__ == "__main__":
    key = jax.random.PRNGKey(0)
    k1, k2, k3, k4, k5, k6, k7, k8 = jax.random.split(key, 8)

    # --- small shapes consistent with the module (B=2, K=16 points, xyz) ----
    B, K = 2, 16
    adv_pc = jax.random.normal(k1, (B, K, 3), dtype=jnp.float32)
    ori_pc = adv_pc + 0.05 * jax.random.normal(k2, (B, K, 3), dtype=jnp.float32)
    weights = jax.random.uniform(k3, (B,), dtype=jnp.float32) + 0.5

    # batch-averaged path (weights=None -> ones), mean folded into the kernel
    out_avg = jax.block_until_ready(l2_dist(adv_pc, ori_pc))
    ref_avg = _reference(adv_pc, ori_pc)
    assert jnp.allclose(out_avg, ref_avg, rtol=1e-5, atol=1e-6), (out_avg, ref_avg)

    # per-batch weighted path
    out_vec = jax.block_until_ready(
        l2_dist(adv_pc, ori_pc, weights=weights, batch_avg=False))
    ref_vec = _reference(adv_pc, ori_pc, weights=weights, batch_avg=False)
    assert jnp.allclose(out_vec, ref_vec, rtol=1e-5, atol=1e-6), (out_vec, ref_vec)

    # native bf16 inputs: no wrapper upcast, f32 accumulation on-chip
    adv_bf = adv_pc.astype(jnp.bfloat16)
    ori_bf = ori_pc.astype(jnp.bfloat16)
    out_bf = jax.block_until_ready(
        l2_dist(adv_bf, ori_bf, weights=weights, batch_avg=False))
    ref_bf = _reference(adv_bf, ori_bf, weights=weights, batch_avg=False)
    assert jnp.allclose(out_bf, ref_bf, rtol=1e-4, atol=1e-5), (out_bf, ref_bf)

    # --- row-blocked tiled path (resident bytes above single-block budget) --
    B2, K2 = 16, 24576                            # N = 73728 -> ~9.4 MiB f32
    adv2 = jax.random.normal(k4, (B2, K2, 3), dtype=jnp.float32)
    ori2 = adv2 + 0.01 * jax.random.normal(k5, (B2, K2, 3), dtype=jnp.float32)
    w2 = jax.random.uniform(k6, (B2,), dtype=jnp.float32) + 0.5
    out2 = jax.block_until_ready(
        l2_dist(adv2, ori2, weights=w2, batch_avg=False))
    ref2 = _reference(adv2, ori2, weights=w2, batch_avg=False)
    assert jnp.allclose(out2, ref2, rtol=1e-4, atol=1e-4), (out2, ref2)

    # --- lane-chunked accumulator path (row too big for one block; tail chunk
    #     of N is masked in-kernel, no HBM padding) ---------------------------
    B3, K3 = 8, 44001                             # N = 132003 (not chunk-multiple)
    adv3 = jax.random.normal(k7, (B3, K3, 3), dtype=jnp.float32)
    ori3 = adv3 + 0.01 * jax.random.normal(k8, (B3, K3, 3), dtype=jnp.float32)
    out3 = jax.block_until_ready(l2_dist(adv3, ori3))
    ref3 = _reference(adv3, ori3)
    assert jnp.allclose(out3, ref3, rtol=1e-4, atol=1e-4), (out3, ref3)

    print("KERNEL_OK")
</pallas_src>

<mosaic_0001>
module attributes {stable_mosaic.version = 11 : i64} {
  func.func @_l2dist_fused_kernel(%arg0: memref<2x48xf32, #tpu.memory_space<vmem>>, %arg1: memref<2x48xf32, #tpu.memory_space<vmem>>, %arg2: memref<2x1xf32, #tpu.memory_space<vmem>>, %arg3: memref<1x1xf32, #tpu.memory_space<vmem>>) attributes {dimension_semantics = [], scalar_prefetch = 0 : i64, scratch_operands = 0 : i64, tpu.core_type = #tpu.core_type<tc>} {
    %c0 = arith.constant 0 : index
    %c0_0 = arith.constant 0 : index
    %0 = vector.load %arg0[%c0, %c0_0] : memref<2x48xf32, #tpu.memory_space<vmem>>, vector<2x48xf32>
    %c0_1 = arith.constant 0 : index
    %c0_2 = arith.constant 0 : index
    %1 = vector.load %arg1[%c0_1, %c0_2] : memref<2x48xf32, #tpu.memory_space<vmem>>, vector<2x48xf32>
    %2 = arith.subf %0, %1 : vector<2x48xf32>
    %3 = arith.mulf %2, %2 : vector<2x48xf32>
    %cst = arith.constant dense<0.000000e+00> : vector<2xf32>
    %4 = vector.multi_reduction <add>, %3, %cst [1] : vector<2x48xf32> to vector<2xf32>
    %5 = vector.shape_cast %4 : vector<2xf32> to vector<2x1xf32>
    %cst_3 = arith.constant 1.000000e-07 : f32
    %6 = vector.broadcast %cst_3 : f32 to vector<2x1xf32>
    %7 = arith.addf %5, %6 : vector<2x1xf32>
    %8 = math.sqrt %7 : vector<2x1xf32>
    %c0_4 = arith.constant 0 : index
    %c0_5 = arith.constant 0 : index
    %9 = vector.load %arg2[%c0_4, %c0_5] : memref<2x1xf32, #tpu.memory_space<vmem>>, vector<2x1xf32>
    %10 = arith.mulf %8, %9 : vector<2x1xf32>
    %cst_6 = arith.constant dense<0.000000e+00> : vector<1xf32>
    %11 = vector.multi_reduction <add>, %10, %cst_6 [0] : vector<2x1xf32> to vector<1xf32>
    %12 = vector.shape_cast %11 : vector<1xf32> to vector<1x1xf32>
    %cst_7 = arith.constant 5.000000e-01 : f32
    %13 = vector.broadcast %cst_7 : f32 to vector<1x1xf32>
    %14 = arith.mulf %12, %13 : vector<1x1xf32>
    %c0_8 = arith.constant 0 : index
    %c0_9 = arith.constant 0 : index
    %15 = vector.load %arg3[%c0_8, %c0_9] : memref<1x1xf32, #tpu.memory_space<vmem>>, vector<1x1xf32>
    tpu.vector_store %arg3[%c0_8, %c0_9], %14 {strides = array<i32>} : memref<1x1xf32, #tpu.memory_space<vmem>>, vector<1x1xf32>,
    return
  }
}

</mosaic_0001>

<llo_original>
// kernel: tpu_custom_call.1
$region0: #{tpu_custom_call.1}
  #allocation0 [shape = 'u32[]', space=smem, size = 0x4, offset = 0x4, fixed_abs, tag = 'smem constant byte address 0x4 - core index']
  #allocation1 [shape = 'u32[72,128]{1,0:T(1,128)}', space=vmem, size = 0x9000, scoped, tag = 'internal scratch']
  %s0 = inlined_call_operand.vmem [shape: f32[2,48], index: 0, kind: input, shape index: {}]
  %s1 = inlined_call_operand.hbm [shape: f32[2,48], index: 1, kind: input, shape index: {}]
  %s2 = inlined_call_operand.vmem [shape: f32[2,1], index: 2, kind: input, shape index: {}]
  %s3 = inlined_call_operand.hbm [shape: f32[1,1], index: 3, kind: output, shape index: {}]
  %s4 = sld [smem:[#allocation0]]
  $region26: #{tpu_custom_call.1} parent=0
    _
  %s6 = ssub.s32 1, %s4
  %s7 = scalar_select 0, %s6, %s4
  $region1: #{tpu_custom_call.1} parent=0
    #allocation2 [shape = 'u8[1024]{0}', space=vmem, size = 0x400, scoped, tag = 'input window, operand 1, single buffered']
    #allocation3 [shape = 's32[1]{0}', space=sflag, size = 0x4, scoped, tag = 'scoped memory for tpu_custom_call.1']
    #allocation4 [shape = 's32[1]{0}', space=sflag, size = 0x4, scoped, tag = 'scoped memory for tpu_custom_call.1']
    #allocation5 [shape = 'u8[512]{0}', space=vmem, size = 0x400, scoped, tag = 'output window, operand 0, single buffered']
    %8 = vsyncpa [#allocation3], 0
    %9 = vsyncpa [#allocation4], 0
    // Predicated region
    $region2: #{tpu_custom_call.1} parent=1 // pred_check
      _
    $region3: #{tpu_custom_call.1} parent=1 // pred_check_branch
      %11 = sbr.rel (0) target = $region5
    $region4: #{tpu_custom_call.1} parent=1 // pred_region
      _
    $region5: #{tpu_custom_call.1} parent=1 // pred_fallthru
      _
    // Predicated region
    $region6: #{tpu_custom_call.1} parent=1 // pred_check
      _
    $region7: #{tpu_custom_call.1} parent=1 // pred_check_branch
      %13 = sbr.rel (0) target = $region9
    $region8: #{tpu_custom_call.1} parent=1 // pred_region
      %15 = vsyncadd [#allocation3], 0
      %s17 = sshll.u32 %s1, 4
      %s18 = int_to_ptr.hbm [resolvable:$true] %s17
      %s19 = sshll.u32 [#allocation2], 4
      %s20 = int_to_ptr.vmem [resolvable:$true] %s19
      %22 = dma.hbm_to_vmem [thread:$0]  %s18, 32, %s20, [#allocation3]
    $region9: #{tpu_custom_call.1} parent=1 // pred_fallthru
      _
    // Predicated region
    $region10: #{tpu_custom_call.1} parent=1 // pred_check
      _
    $region11: #{tpu_custom_call.1} parent=1 // pred_check_branch
      %24 = sbr.rel (0) target = $region13
    $region12: #{tpu_custom_call.1} parent=1 // pred_region
      _
    $region13: #{tpu_custom_call.1} parent=1 // pred_fallthru
      _
    // Predicated region
    $region14: #{tpu_custom_call.1} parent=1 // pred_check
      _
    $region15: #{tpu_custom_call.1} parent=1 // pred_check_branch
      %26 = sbr.rel (0) target = $region17
    $region16: #{tpu_custom_call.1} parent=1 // pred_region
      %28 = dma.done [#allocation3], 32
    $region17: #{tpu_custom_call.1} parent=1 // pred_fallthru
      _
    %v29 = vld [vmem:[%s0] sm:$0x3]
    %v30 = vld [vmem:[#allocation2] sm:$0x3]
    %v31 = vsub.f32 %v29, %v30
    %v32 = vmul.f32 %v31, %v31
    %vm33 = vcmask 386048
    %v34 = vsel %vm33, %v32, 0.0
    %35 = vadd.xlane.f32.xlu0 %v34
    %v36 = vpop.xlane.xlu0 %35
    %v37 = vadd.f32 %v36, 1e-07
    %v38 = vrsqrt.pop %v37
    %v39 = vmul.f32 %v38, %v37
    %v40 = vmul.f32 %v39, %v38
    %v41 = vmul.f32 0.5, %v40
    %v42 = vsub.f32 1.5, %v41
    %v43 = vmul.f32 %v38, %v42
    %v44 = vmul.f32 %v37, %v43
    %vm45 = vcmp.eq.f32.partialorder %v37, inf
    %v46 = vsel %vm45, %v37, %v44
    %vm47 = vcmp.eq.f32.partialorder %v37, 0.0
    %v48 = vand.u32 %v37, 2147483648
    %v49 = vsel %vm47, %v48, %v46
    %v50 = vld [vmem:[%s2] sm:$0x3]
    %v51 = vmul.f32 %v49, %v50
    %vm52 = vcmask 1024
    %v53 = vsel %vm52, %v51, 0.0
    %v54 = vrot.slane %v53, 4
    %v55 = vadd.f32 %v53, %v54
    %v56 = vrot.slane %v55, 2
    %v57 = vadd.f32 %v55, %v56
    %v58 = vrot.slane %v57, 1
    %v59 = vadd.f32 %v57, %v58
    %v60 = vmul.f32 %v59, 0.5
    %vm61 = vcmask 0
    %62 = vst.msk [vmem:[#allocation5] sm:$0x1] %vm61, %v60
    // Predicated region
    $region18: #{tpu_custom_call.1} parent=1 // pred_check
      _
    $region19: #{tpu_custom_call.1} parent=1 // pred_check_branch
      %64 = sbr.rel (0) target = $region21
    $region20: #{tpu_custom_call.1} parent=1 // pred_region
      %66 = vsyncadd [#allocation4], 0
      %s68 = sshll.u32 [#allocation5], 4
      %s69 = int_to_ptr.vmem [resolvable:$true] %s68
      %s70 = sshll.u32 %s3, 4
      %s71 = int_to_ptr.hbm [resolvable:$true] %s70
      %73 = dma.vmem_to_hbm [thread:$0]  %s69, 16, %s71, [#allocation4]
    $region21: #{tpu_custom_call.1} parent=1 // pred_fallthru
      _
    // Predicated region
    $region22: #{tpu_custom_call.1} parent=1 // pred_check
      _
    $region23: #{tpu_custom_call.1} parent=1 // pred_check_branch
      %75 = sbr.rel (0) target = $region25
    $region24: #{tpu_custom_call.1} parent=1 // pred_region
      %77 = dma.done [#allocation4], 16
    $region25: #{tpu_custom_call.1} parent=1 // pred_fallthru
      _
    %78 = vsyncpa [#allocation3], 1
    %79 = vsyncpa [#allocation4], 1

</llo_original>
